<compile_context>
chip_gen: v5e
topology: v5e:2x2
jax: 0.10.0
libtpu: 0.0.40
codegen_flags: <defaults>
</compile_context>

<pallas_src>
import math

import numpy as np
import jax
import jax.numpy as jnp
from jax import lax
from jax.experimental import pallas as pl
from jax.experimental.pallas import tpu as pltpu

LANES = 128
NUM_VALS = 256              # size of the learnable quantization table
SCAN_UNROLL = 8             # compare/select steps per statically unrolled group
NUM_GROUPS = NUM_VALS // SCAN_UNROLL   # 32 groups (midpoints padded to 256)
MAX_CHUNK_ROWS = 64         # rows kept live in vregs per scan


def make_fp8_values() -> np.ndarray:
    """Deterministic init identical to LearnableFP8Activation.__init__."""
    init_vals = [0.0, 0.25, 0.5, 0.75, 1.0, 1.5, 2.0, 3.0, 4.0, 6.0, 8.0,
                 12.0, 16.0, 24.0, 32.0, 48.0, -0.25, -0.5, -0.75, -1.0,
                 -1.5, -2.0, -3.0, -4.0, -6.0, -8.0, -12.0, -16.0, -24.0,
                 -32.0, -48.0, -64.0]
    vals = sorted(set(init_vals + [float(i) for i in range(-128, 128)]))
    return np.asarray(vals[:NUM_VALS], dtype=np.float32)


def _round_up(x: int, m: int) -> int:
    return ((x + m - 1) // m) * m


def _pick_block_rows(rows: int):
    """Largest block that still yields a grid of >= 8 steps (megacore-friendly);
    otherwise the smallest 8-row-aligned block so even small inputs get a
    multi-step 'parallel' grid axis."""
    padded_rows = _round_up(rows, 8)
    cands = [br for br in (512, 256, 128, 64, 32, 16, 8) if padded_rows % br == 0]
    for br in cands:                       # largest first
        if padded_rows // br >= 8:
            return br, padded_rows
    return cands[-1], padded_rows


def _make_kernel(block_rows: int, chunk_rows: int, cdtype):
    n_chunks = block_rows // chunk_rows

    def kernel(x_ref, vals_ref, mids_ref, g0_ref, o_ref):
        # x_ref/o_ref : (block_rows, 128) VMEM tiles.
        # vals_ref    : (257,) sorted table (+1 dup pad) in SMEM.
        # mids_ref    : (256,) bucket midpoints (+inf pad) in SMEM.
        # g0_ref      : (1,) int32 in SMEM -- first 8-step group that can produce a
        #               non-negative quantized value (negative-prefix pruning).
        g0 = g0_ref[0]
        # relu(vals[0]) is the correct answer for everything the pruned scan skips.
        init_val = jnp.maximum(vals_ref[0], 0.0).astype(cdtype)
        out_init = jnp.full((chunk_rows, LANES), init_val, dtype=cdtype)

        def process_chunk(c, carry):
            r0 = pl.multiple_of(c * chunk_rows, chunk_rows)
            x = x_ref[pl.ds(r0, chunk_rows), :].astype(cdtype)

            # Running select over sorted midpoints: after the scan,
            #   out == vals[k],  k = #{j : x > mids[j]}
            # (strict '>' keeps the reference's dist_low <= dist_high -> low ties),
            # except that buckets below the dynamic start stay at init (they are
            # negative and ReLU to 0 anyway).
            def group_body(g, out):
                j0 = g * SCAN_UNROLL
                for u in range(SCAN_UNROLL):            # statically unrolled
                    j = j0 + u
                    out = jnp.where(x > mids_ref[j].astype(cdtype),
                                    vals_ref[j + 1].astype(cdtype), out)
                return out

            out = lax.fori_loop(g0, NUM_GROUPS, group_body, out_init)
            # Exact ReLU epilogue; also corrects the (at most 7) pre-prefix steps
            # included because g0 is rounded down to a group boundary.
            out = jnp.maximum(out, jnp.zeros((), cdtype))
            o_ref[pl.ds(r0, chunk_rows), :] = out.astype(o_ref.dtype)
            return carry

        lax.fori_loop(0, n_chunks, process_chunk, 0)

    return kernel


def fp8_relu(x, fp8_values):
    """Pallas FP8ReLU forward: nearest-table quantization + ReLU, elementwise."""
    # TODO(synk): MXU offload of the accumulate half (0/1 mask @ diff table) is a
    # further ~2x on v6e/v7x; kept on the VPU here for simplicity/portability.
    orig_shape = x.shape
    orig_dtype = x.dtype
    n = x.size

    rows = pl.cdiv(n, LANES)
    block_rows, padded_rows = _pick_block_rows(rows)
    n_pad = padded_rows * LANES

    xf = x.reshape(-1)
    if n_pad != n:
        # TODO(synk): replace whole-tensor pad/slice with a masked store of the final
        # partial block to save the extra HBM passes on ragged sizes.
        xf = jnp.pad(xf, (0, n_pad - n))
    x2 = xf.reshape(padded_rows, LANES)

    # forward() sorts the learnable values; precompute bucket midpoints.
    vals = jnp.sort(fp8_values.astype(jnp.float32))                      # (256,)
    mids = (vals[:-1] + vals[1:]) * jnp.float32(0.5)                     # (255,)
    # Pad to 256 midpoints (32 groups of 8); +inf makes the padded step a no-op.
    mids_p = jnp.concatenate([mids, jnp.array([jnp.inf], jnp.float32)])  # (256,)
    vals_p = jnp.concatenate([vals, vals[-1:]])                          # (257,)
    # Negative-prefix pruning: quantized values with index < num_neg are < 0 and
    # ReLU to 0, so the scan can start at midpoint num_neg-1 (rounded to a group).
    num_neg = jnp.sum(vals < 0.0).astype(jnp.int32)
    g0 = (jnp.maximum(num_neg - 1, 0) // SCAN_UNROLL).reshape(1).astype(jnp.int32)

    # bf16 inputs scan in packed bf16 (v6e/v7x VALU win); f32 stays exact f32.
    cdtype = jnp.bfloat16 if orig_dtype == jnp.bfloat16 else jnp.float32
    chunk_rows = math.gcd(block_rows, MAX_CHUNK_ROWS)
    kernel = _make_kernel(block_rows, chunk_rows, cdtype)

    out = pl.pallas_call(
        kernel,
        out_shape=jax.ShapeDtypeStruct((padded_rows, LANES), orig_dtype),
        grid=(padded_rows // block_rows,),
        in_specs=[
            pl.BlockSpec((block_rows, LANES), lambda i: (i, 0)),
            pl.BlockSpec(memory_space=pltpu.MemorySpace.SMEM),   # sorted vals (+pad)
            pl.BlockSpec(memory_space=pltpu.MemorySpace.SMEM),   # midpoints (+pad)
            pl.BlockSpec(memory_space=pltpu.MemorySpace.SMEM),   # scan start group
        ],
        out_specs=pl.BlockSpec((block_rows, LANES), lambda i: (i, 0)),
        compiler_params=pltpu.CompilerParams(
            dimension_semantics=("parallel",),
        ),
    )(x2, vals_p, mids_p, g0)

    return out.reshape(-1)[:n].reshape(orig_shape)


def _reference(x, fp8_values):
    """Pure-JAX transcription of the PyTorch FP8ReLU forward, for verification."""
    v = jnp.sort(fp8_values.astype(jnp.float32))
    xf = x.reshape(-1).astype(jnp.float32)
    idx = jnp.searchsorted(v, xf, side="left")
    idx = jnp.clip(idx, 1, v.shape[0] - 1)
    high = v[idx]
    low = v[idx - 1]
    q = jnp.where(jnp.abs(xf - low) <= jnp.abs(xf - high), low, high)
    q = jnp.where(q < 0.0, jnp.float32(0.0), q)
    return q.reshape(x.shape).astype(x.dtype)


if __name__ == "__main__":
    key = jax.random.PRNGKey(0)
    # NCHW input: batch=2, channels=4, spatial=16x16
    x = jax.random.normal(key, (2, 4, 16, 16), dtype=jnp.float32) * 5.0

    fp8_values = jnp.asarray(make_fp8_values())

    y = jax.block_until_ready(fp8_relu(x, fp8_values))
    y_ref = _reference(x, fp8_values)
    np.testing.assert_array_equal(np.asarray(y), np.asarray(y_ref))

    print("KERNEL_OK")
</pallas_src>

<mosaic_0001>
module attributes {stable_mosaic.version = 11 : i64} {
  func.func @kernel(%arg0: i32, %arg1: memref<8x128xf32, #tpu.memory_space<vmem>>, %arg2: memref<257xf32, #tpu.memory_space<smem>>, %arg3: memref<256xf32, #tpu.memory_space<smem>>, %arg4: memref<1xi32, #tpu.memory_space<smem>>, %arg5: memref<8x128xf32, #tpu.memory_space<vmem>>) attributes {dimension_semantics = [#tpu.dimension_semantics<parallel>], iteration_bounds = array<i64: 2>, scalar_prefetch = 0 : i64, scratch_operands = 0 : i64, tpu.core_type = #tpu.core_type<tc>, window_params = [{transform_indices = @transform_0, window_bounds = array<i64: 8, 128>}, {transform_indices = @transform_1, window_bounds = array<i64: 257>}, {transform_indices = @transform_2, window_bounds = array<i64: 256>}, {transform_indices = @transform_3, window_bounds = array<i64: 1>}, {transform_indices = @transform_4, window_bounds = array<i64: 8, 128>}]} {
    %c0 = arith.constant 0 : index
    %0 = memref.load %arg4[%c0] : memref<1xi32, #tpu.memory_space<smem>>
    %c0_0 = arith.constant 0 : index
    %1 = memref.load %arg2[%c0_0] : memref<257xf32, #tpu.memory_space<smem>>
    %cst = arith.constant 0.000000e+00 : f32
    %2 = arith.maximumf %1, %cst : f32
    %3 = vector.broadcast %2 : f32 to vector<8x128xf32>
    %c0_i32 = arith.constant 0 : i32
    %c8_i32 = arith.constant 8 : i32
    %4 = arith.muli %c0_i32, %c8_i32 : i32
    %5 = tpu.assume_multiple %4, 8 : i32
    %6 = arith.index_cast %5 : i32 to index
    %c0_1 = arith.constant 0 : index
    %7 = vector.load %arg1[%6, %c0_1] : memref<8x128xf32, #tpu.memory_space<vmem>>, vector<8x128xf32>
    %c32_i32 = arith.constant 32 : i32
    %8 = arith.subi %c32_i32, %0 : i32
    %9 = arith.addi %0, %8 : i32
    %c1_i32 = arith.constant 1 : i32
    %10 = scf.for %arg6 = %0 to %9 step %c1_i32 iter_args(%arg7 = %3) -> (vector<8x128xf32>)  : i32 {
      %c8_i32_5 = arith.constant 8 : i32
      %15 = arith.muli %arg6, %c8_i32_5 : i32
      %c0_i32_6 = arith.constant 0 : i32
      %16 = arith.addi %15, %c0_i32_6 : i32
      %17 = arith.index_cast %16 : i32 to index
      %18 = memref.load %arg3[%17] : memref<256xf32, #tpu.memory_space<smem>>
      %19 = vector.broadcast %18 : f32 to vector<8x128xf32>
      %20 = arith.cmpf ogt, %7, %19 : vector<8x128xf32>
      %c1_i32_7 = arith.constant 1 : i32
      %21 = arith.addi %16, %c1_i32_7 : i32
      %22 = arith.index_cast %21 : i32 to index
      %23 = memref.load %arg2[%22] : memref<257xf32, #tpu.memory_space<smem>>
      %24 = vector.broadcast %23 : f32 to vector<8x128xf32>
      %25 = arith.select %20, %24, %arg7 : vector<8x128xi1>, vector<8x128xf32>
      %c1_i32_8 = arith.constant 1 : i32
      %26 = arith.addi %15, %c1_i32_8 : i32
      %27 = arith.index_cast %26 : i32 to index
      %28 = memref.load %arg3[%27] : memref<256xf32, #tpu.memory_space<smem>>
      %29 = vector.broadcast %28 : f32 to vector<8x128xf32>
      %30 = arith.cmpf ogt, %7, %29 : vector<8x128xf32>
      %c1_i32_9 = arith.constant 1 : i32
      %31 = arith.addi %26, %c1_i32_9 : i32
      %32 = arith.index_cast %31 : i32 to index
      %33 = memref.load %arg2[%32] : memref<257xf32, #tpu.memory_space<smem>>
      %34 = vector.broadcast %33 : f32 to vector<8x128xf32>
      %35 = arith.select %30, %34, %25 : vector<8x128xi1>, vector<8x128xf32>
      %c2_i32 = arith.constant 2 : i32
      %36 = arith.addi %15, %c2_i32 : i32
      %37 = arith.index_cast %36 : i32 to index
      %38 = memref.load %arg3[%37] : memref<256xf32, #tpu.memory_space<smem>>
      %39 = vector.broadcast %38 : f32 to vector<8x128xf32>
      %40 = arith.cmpf ogt, %7, %39 : vector<8x128xf32>
      %c1_i32_10 = arith.constant 1 : i32
      %41 = arith.addi %36, %c1_i32_10 : i32
      %42 = arith.index_cast %41 : i32 to index
      %43 = memref.load %arg2[%42] : memref<257xf32, #tpu.memory_space<smem>>
      %44 = vector.broadcast %43 : f32 to vector<8x128xf32>
      %45 = arith.select %40, %44, %35 : vector<8x128xi1>, vector<8x128xf32>
      %c3_i32 = arith.constant 3 : i32
      %46 = arith.addi %15, %c3_i32 : i32
      %47 = arith.index_cast %46 : i32 to index
      %48 = memref.load %arg3[%47] : memref<256xf32, #tpu.memory_space<smem>>
      %49 = vector.broadcast %48 : f32 to vector<8x128xf32>
      %50 = arith.cmpf ogt, %7, %49 : vector<8x128xf32>
      %c1_i32_11 = arith.constant 1 : i32
      %51 = arith.addi %46, %c1_i32_11 : i32
      %52 = arith.index_cast %51 : i32 to index
      %53 = memref.load %arg2[%52] : memref<257xf32, #tpu.memory_space<smem>>
      %54 = vector.broadcast %53 : f32 to vector<8x128xf32>
      %55 = arith.select %50, %54, %45 : vector<8x128xi1>, vector<8x128xf32>
      %c4_i32 = arith.constant 4 : i32
      %56 = arith.addi %15, %c4_i32 : i32
      %57 = arith.index_cast %56 : i32 to index
      %58 = memref.load %arg3[%57] : memref<256xf32, #tpu.memory_space<smem>>
      %59 = vector.broadcast %58 : f32 to vector<8x128xf32>
      %60 = arith.cmpf ogt, %7, %59 : vector<8x128xf32>
      %c1_i32_12 = arith.constant 1 : i32
      %61 = arith.addi %56, %c1_i32_12 : i32
      %62 = arith.index_cast %61 : i32 to index
      %63 = memref.load %arg2[%62] : memref<257xf32, #tpu.memory_space<smem>>
      %64 = vector.broadcast %63 : f32 to vector<8x128xf32>
      %65 = arith.select %60, %64, %55 : vector<8x128xi1>, vector<8x128xf32>
      %c5_i32 = arith.constant 5 : i32
      %66 = arith.addi %15, %c5_i32 : i32
      %67 = arith.index_cast %66 : i32 to index
      %68 = memref.load %arg3[%67] : memref<256xf32, #tpu.memory_space<smem>>
      %69 = vector.broadcast %68 : f32 to vector<8x128xf32>
      %70 = arith.cmpf ogt, %7, %69 : vector<8x128xf32>
      %c1_i32_13 = arith.constant 1 : i32
      %71 = arith.addi %66, %c1_i32_13 : i32
      %72 = arith.index_cast %71 : i32 to index
      %73 = memref.load %arg2[%72] : memref<257xf32, #tpu.memory_space<smem>>
      %74 = vector.broadcast %73 : f32 to vector<8x128xf32>
      %75 = arith.select %70, %74, %65 : vector<8x128xi1>, vector<8x128xf32>
      %c6_i32 = arith.constant 6 : i32
      %76 = arith.addi %15, %c6_i32 : i32
      %77 = arith.index_cast %76 : i32 to index
      %78 = memref.load %arg3[%77] : memref<256xf32, #tpu.memory_space<smem>>
      %79 = vector.broadcast %78 : f32 to vector<8x128xf32>
      %80 = arith.cmpf ogt, %7, %79 : vector<8x128xf32>
      %c1_i32_14 = arith.constant 1 : i32
      %81 = arith.addi %76, %c1_i32_14 : i32
      %82 = arith.index_cast %81 : i32 to index
      %83 = memref.load %arg2[%82] : memref<257xf32, #tpu.memory_space<smem>>
      %84 = vector.broadcast %83 : f32 to vector<8x128xf32>
      %85 = arith.select %80, %84, %75 : vector<8x128xi1>, vector<8x128xf32>
      %c7_i32 = arith.constant 7 : i32
      %86 = arith.addi %15, %c7_i32 : i32
      %87 = arith.index_cast %86 : i32 to index
      %88 = memref.load %arg3[%87] : memref<256xf32, #tpu.memory_space<smem>>
      %89 = vector.broadcast %88 : f32 to vector<8x128xf32>
      %90 = arith.cmpf ogt, %7, %89 : vector<8x128xf32>
      %c1_i32_15 = arith.constant 1 : i32
      %91 = arith.addi %86, %c1_i32_15 : i32
      %92 = arith.index_cast %91 : i32 to index
      %93 = memref.load %arg2[%92] : memref<257xf32, #tpu.memory_space<smem>>
      %94 = vector.broadcast %93 : f32 to vector<8x128xf32>
      %95 = arith.select %90, %94, %85 : vector<8x128xi1>, vector<8x128xf32>
      scf.yield %95 : vector<8x128xf32>
    }
    %cst_2 = arith.constant 0.000000e+00 : f32
    %11 = vector.broadcast %cst_2 : f32 to vector<8x128xf32>
    %12 = arith.maximumf %10, %11 : vector<8x128xf32>
    %13 = arith.index_cast %5 : i32 to index
    %c0_3 = arith.constant 0 : index
    %14 = vector.load %arg5[%13, %c0_3] : memref<8x128xf32, #tpu.memory_space<vmem>>, vector<8x128xf32>
    tpu.vector_store %arg5[%13, %c0_3], %12 {strides = array<i32>} : memref<8x128xf32, #tpu.memory_space<vmem>>, vector<8x128xf32>,
    %c1_i32_4 = arith.constant 1 : i32
    return
  }
  func.func @transform_0(%arg0: i32) -> (i32, i32) {
    %c0_i32 = arith.constant 0 : i32
    %c0_i32_0 = arith.constant 0 : i32
    return %arg0, %c0_i32 : i32, i32
  }
  func.func @transform_1(%arg0: i32) -> i32 {
    %c0_i32 = arith.constant 0 : i32
    %c0_i32_0 = arith.constant 0 : i32
    return %c0_i32 : i32
  }
  func.func @transform_2(%arg0: i32) -> i32 {
    %c0_i32 = arith.constant 0 : i32
    %c0_i32_0 = arith.constant 0 : i32
    return %c0_i32 : i32
  }
  func.func @transform_3(%arg0: i32) -> i32 {
    %c0_i32 = arith.constant 0 : i32
    %c0_i32_0 = arith.constant 0 : i32
    return %c0_i32 : i32
  }
  func.func @transform_4(%arg0: i32) -> (i32, i32) {
    %c0_i32 = arith.constant 0 : i32
    %c0_i32_0 = arith.constant 0 : i32
    return %arg0, %c0_i32 : i32, i32
  }
}

</mosaic_0001>

<llo_original>
// kernel: tpu_custom_call.1
$region0: #{tpu_custom_call.1}
  #allocation0 [shape = 'u32[]', space=smem, size = 0x4, offset = 0x4, fixed_abs, tag = 'smem constant byte address 0x4 - core index']
  #allocation1 [shape = 'u32[72,128]{1,0:T(1,128)}', space=vmem, size = 0x9000, scoped, tag = 'internal scratch']
  #allocation2 [shape = 's32[1]{0:T(128)S(6)}', space=smem, size = 0x200, scoped, tag = 'scoped memory for tpu_custom_call.1']
  %s0 = inlined_call_operand.hbm [shape: f32[16,128], index: 0, kind: input, shape index: {}]
  %s1 = inlined_call_operand.hbm [shape: f32[257], index: 1, kind: input, shape index: {}]
  %s2 = inlined_call_operand.vmem [shape: f32[256], index: 2, kind: input, shape index: {}]
  %s3 = inlined_call_operand.<no memory space> [shape: s32[1], index: 3, kind: input, shape index: {}]
  %s4 = inlined_call_operand.hbm [shape: f32[16,128], index: 4, kind: output, shape index: {}]
  %s5 = sld [smem:[#allocation0]]
  $region68: #{tpu_custom_call.1} parent=0
    _
  %s7 = ssub.s32 1, %s5
  %s8 = scalar_select 0, %s7, %s5
  %9 = sst [smem:[#allocation2]] %s3
  $region1: #{tpu_custom_call.1} parent=0
    #allocation3 [shape = 'u8[8192]{0}', space=vmem, size = 0x2000, scoped, tag = 'input window, operand 0']
    #allocation4 [shape = 's32[2]{0}', space=sflag, size = 0x8, scoped, tag = 'scoped memory for tpu_custom_call.1']
    #allocation5 [shape = 's32[2]{0}', space=sflag, size = 0x8, scoped, tag = 'scoped memory for tpu_custom_call.1']
    #allocation6 [shape = 's32[2]{0}', space=sflag, size = 0x8, scoped, tag = 'scoped memory for tpu_custom_call.1']
    #allocation7 [shape = 's32[2]{0}', space=sflag, size = 0x8, scoped, tag = 'scoped memory for tpu_custom_call.1']
    #allocation8 [shape = 'u8[1536]{0}', space=smem, size = 0x600, scoped, tag = 'input window, operand 1, single buffered']
    #allocation9 [shape = 'u8[1024]{0}', space=smem, size = 0x400, scoped, tag = 'input window, operand 2, single buffered']
    #allocation10 [shape = 'u8[8192]{0}', space=vmem, size = 0x2000, scoped, tag = 'output window, operand 0']
    %10 = vsyncpa [#allocation4], 0
    %s11 = scalar_lea.sflag [#allocation4], 1
    %12 = vsyncpa %s11, 0
    %13 = vsyncpa [#allocation6], 0
    %14 = vsyncpa [#allocation7], 0
    %15 = vsyncpa [#allocation5], 0
    %s16 = scalar_lea.sflag [#allocation5], 1
    %17 = vsyncpa %s16, 0
    loop: start=0, step=1, limit=4
    $region2: #{tpu_custom_call.1} parent=1 // loop_pre_header
      _
    $region3: #{tpu_custom_call.1} parent=1 // loop_header
      %s19 = sphi 0, %s23
      %p20 = scmp.ge.s32.totalorder %s19, 4
      %s29 = sphi 0, %s31
      %s32 = sphi 0, %s29
      %s33 = sphi 0, %s32
      %s49 = sphi 0, %s33
      %s53 = sphi 0, %s53
      %s55 = sphi 0, %s53
      %s56 = sphi 0, %s55
      %s70 = sphi 0, %s56
      %s74 = sphi 0, %s74
      %s76 = sphi 0, %s74
      %s77 = sphi 0, %s76
      %s91 = sphi 0, %s77
      %s95 = sphi 0, %s95
      %s97 = sphi 0, %s95
      %s98 = sphi 0, %s97
      %s112 = sphi 0, %s98
      %s118 = sphi 0, %s120
      %s121 = sphi 0, %s118
      %s122 = sphi 0, %s121
      %s138 = sphi 0, %s122
    $region4: #{tpu_custom_call.1} parent=1 // loop_header_branch
      %22 = sbr.rel (%p20) target = $region8
    $region5: #{tpu_custom_call.1} parent=1 // loop_body
      %s24 = ssub.s32 %s19, 1
      %s25 = ssub.s32 %s19, 2
      %s26 = sadd.s32 %s19, 1
      %s27 = ssub.s32 %s19, %s26
      %p28 = scmp.eq.s32.totalorder %s27, 0
      %s30 = sadd.s32 %s29, 1
      %s31 = scalar_select %p28, %s29, %s30
      %p34 = pneg %p28
      %p35 = scmp.eq.s32.totalorder %s19, 1
      %p36 = por %p34, %p35
      %p37 = scmp.ne.s32.totalorder %s29, %s32
      %p38 = scmp.eq.s32.totalorder %s19, 0
      %p39 = por %p37, %p38
      %p40 = scmp.ne.s32.totalorder %s29, %s32
      %p41 = scmp.eq.s32.totalorder %s24, 1
      %p42 = por %p40, %p41
      %p43 = scmp.ne.s32.totalorder %s32, %s33
      %p44 = scmp.eq.s32.totalorder %s24, 0
      %p45 = por %p43, %p44
      %p46 = scmp.ne.s32.totalorder %s32, %s33
      %p47 = scmp.eq.s32.totalorder %s25, 1
      %p48 = por %p46, %p47
      %p50 = scmp.ne.s32.totalorder %s33, %s49
      %p51 = scmp.eq.s32.totalorder %s25, 0
      %p52 = por %p50, %p51
      %s54 = sadd.s32 %s53, 1
      %p57 = scmp.eq.s32.totalorder %s19, 1
      %p58 = scmp.ne.s32.totalorder %s53, %s55
      %p59 = scmp.eq.s32.totalorder %s19, 0
      %p60 = por %p58, %p59
      %p61 = scmp.ne.s32.totalorder %s53, %s55
      %p62 = scmp.eq.s32.totalorder %s24, 1
      %p63 = por %p61, %p62
      %p64 = scmp.ne.s32.totalorder %s55, %s56
      %p65 = scmp.eq.s32.totalorder %s24, 0
      %p66 = por %p64, %p65
      %p67 = scmp.ne.s32.totalorder %s55, %s56
      %p68 = scmp.eq.s32.totalorder %s25, 1
      %p69 = por %p67, %p68
      %p71 = scmp.ne.s32.totalorder %s56, %s70
      %p72 = scmp.eq.s32.totalorder %s25, 0
      %p73 = por %p71, %p72
      %s75 = sadd.s32 %s74, 1
      %p78 = scmp.eq.s32.totalorder %s19, 1
      %p79 = scmp.ne.s32.totalorder %s74, %s76
      %p80 = scmp.eq.s32.totalorder %s19, 0
      %p81 = por %p79, %p80
      %p82 = scmp.ne.s32.totalorder %s74, %s76
      %p83 = scmp.eq.s32.totalorder %s24, 1
      %p84 = por %p82, %p83
      %p85 = scmp.ne.s32.totalorder %s76, %s77
      %p86 = scmp.eq.s32.totalorder %s24, 0
      %p87 = por %p85, %p86
      %p88 = scmp.ne.s32.totalorder %s76, %s77
      %p89 = scmp.eq.s32.totalorder %s25, 1
      %p90 = por %p88, %p89
      %p92 = scmp.ne.s32.totalorder %s77, %s91
      %p93 = scmp.eq.s32.totalorder %s25, 0
      %p94 = por %p92, %p93
      %s96 = sadd.s32 %s95, 1
      %p99 = scmp.eq.s32.totalorder %s19, 1
      %p100 = scmp.ne.s32.totalorder %s95, %s97
      %p101 = scmp.eq.s32.totalorder %s19, 0
      %p102 = por %p100, %p101
      %p103 = scmp.ne.s32.totalorder %s95, %s97
      %p104 = scmp.eq.s32.totalorder %s24, 1
      %p105 = por %p103, %p104
      %p106 = scmp.ne.s32.totalorder %s97, %s98
      %p107 = scmp.eq.s32.totalorder %s24, 0
      %p108 = por %p106, %p107
      %p109 = scmp.ne.s32.totalorder %s97, %s98
      %p110 = scmp.eq.s32.totalorder %s25, 1
      %p111 = por %p109, %p110
      %p113 = scmp.ne.s32.totalorder %s98, %s112
      %p114 = scmp.eq.s32.totalorder %s25, 0
      %p115 = por %p113, %p114
      %s116 = ssub.s32 %s19, %s26
      %p117 = scmp.eq.s32.totalorder %s116, 0
      %s119 = sadd.s32 %s118, 1
      %s120 = scalar_select %p117, %s118, %s119
      %p123 = pneg %p117
      %p124 = scmp.eq.s32.totalorder %s19, 1
      %p125 = por %p123, %p124
      %p126 = scmp.ne.s32.totalorder %s118, %s121
      %p127 = scmp.eq.s32.totalorder %s19, 0
      %p128 = por %p126, %p127
      %p129 = scmp.ne.s32.totalorder %s118, %s121
      %p130 = scmp.eq.s32.totalorder %s24, 1
      %p131 = por %p129, %p130
      %p132 = scmp.ne.s32.totalorder %s121, %s122
      %p133 = scmp.eq.s32.totalorder %s24, 0
      %p134 = por %p132, %p133
      %p135 = scmp.ne.s32.totalorder %s121, %s122
      %p136 = scmp.eq.s32.totalorder %s25, 1
      %p137 = por %p135, %p136
      %p139 = scmp.ne.s32.totalorder %s122, %s138
      %p140 = scmp.eq.s32.totalorder %s25, 0
      %p141 = por %p139, %p140
      %p142 = scmp.le.s32.totalorder 1, %s19
      %p143 = scmp.lt.s32.totalorder %s19, 3
      %p144 = pnand %p142, %p143
      %p145 = pneg %p144
      // Predicated region
      $region9: #{tpu_custom_call.1} parent=5 // pred_check
        _
      $region10: #{tpu_custom_call.1} parent=5 // pred_check_branch
        %147 = sbr.rel (%p144) target = $region12
      $region11: #{tpu_custom_call.1} parent=5 // pred_region
        %s148 = ssub.s32 %s19, 1
        // Predicated region
        $region13: #{tpu_custom_call.1} parent=11 // pred_check
          %p149 = pneg %p66
        $region14: #{tpu_custom_call.1} parent=11 // pred_check_branch
          %151 = sbr.rel (%p149) target = $region16
        $region15: #{tpu_custom_call.1} parent=11 // pred_region
          %153 = vsyncadd [#allocation6], 0
          %s155 = sshll.u32 %s1, 4
          %s156 = int_to_ptr.hbm [resolvable:$true] %s155
          %158 = dma.hbm_to_smem %s156, 48, [#allocation8], [#allocation6]
        $region16: #{tpu_custom_call.1} parent=11 // pred_fallthru
          _
        // Predicated region
        $region17: #{tpu_custom_call.1} parent=11 // pred_check
          %p159 = pneg %p87
        $region18: #{tpu_custom_call.1} parent=11 // pred_check_branch
          %161 = sbr.rel (%p159) target = $region20
        $region19: #{tpu_custom_call.1} parent=11 // pred_region
          %163 = vsyncadd [#allocation7], 0
          %s165 = sshll.u32 %s2, 4
          %s166 = int_to_ptr.vmem [resolvable:$true] %s165
          %168 = dma.vmem_to_smem %s166, 32, [#allocation9], [#allocation7]
        $region20: #{tpu_custom_call.1} parent=11 // pred_fallthru
          _
        // Predicated region
        $region21: #{tpu_custom_call.1} parent=11 // pred_check
          %p169 = pneg %p108
        $region22: #{tpu_custom_call.1} parent=11 // pred_check_branch
          %171 = sbr.rel (%p169) target = $region24
        $region23: #{tpu_custom_call.1} parent=11 // pred_region
          _
        $region24: #{tpu_custom_call.1} parent=11 // pred_fallthru
          _
      $region12: #{tpu_custom_call.1} parent=5 // pred_fallthru
        _
      %p172 = scmp.lt.s32.totalorder %s19, 2
      // Predicated region
      $region25: #{tpu_custom_call.1} parent=5 // pred_check
        %p173 = pneg %p172
      $region26: #{tpu_custom_call.1} parent=5 // pred_check_branch
        %175 = sbr.rel (%p173) target = $region28
      $region27: #{tpu_custom_call.1} parent=5 // pred_region
        // Predicated region
        $region29: #{tpu_custom_call.1} parent=27 // pred_check
          %p176 = pneg %p39
        $region30: #{tpu_custom_call.1} parent=27 // pred_check_branch
          %178 = sbr.rel (%p176) target = $region32
        $region31: #{tpu_custom_call.1} parent=27 // pred_region
          %s179 = sand.u32 %s29, 1
          %s180 = scalar_lea.sflag [#allocation4], %s179
          %s181 = sand.u32 %s29, 1
          %s182 = smul.addr %s181, 8
          %s183 = scalar_lea.vmem [#allocation3], %s182
          %185 = vsyncadd %s180, 0
          %s186 = smul.addr %s19, 8
          %s187 = scalar_lea.hbm %s0, %s186
          %s189 = sshll.u32 %s187, 4
          %s190 = int_to_ptr.hbm [resolvable:$true] %s189
          %s191 = sshll.u32 %s183, 4
          %s192 = int_to_ptr.vmem [resolvable:$true] %s191
          %194 = dma.hbm_to_vmem [thread:$0]  %s190, 128, %s192, %s180
        $region32: #{tpu_custom_call.1} parent=27 // pred_fallthru
          _
      $region28: #{tpu_custom_call.1} parent=5 // pred_fallthru
        _
      %p195 = scmp.le.s32.totalorder 1, %s19
      %p196 = scmp.lt.s32.totalorder %s19, 3
      %p197 = pnand %p195, %p196
      %p198 = pneg %p197
      // Predicated region
      $region33: #{tpu_custom_call.1} parent=5 // pred_check
        _
      $region34: #{tpu_custom_call.1} parent=5 // pred_check_branch
        %200 = sbr.rel (%p197) target = $region36
      $region35: #{tpu_custom_call.1} parent=5 // pred_region
        %s201 = ssub.s32 %s19, 1
        %s202 = sand.u32 %s32, 1
        %s203 = scalar_lea.sflag [#allocation4], %s202
        %s204 = sand.u32 %s32, 1
        %s205 = smul.addr %s204, 8
        %s206 = scalar_lea.vmem [#allocation3], %s205
        // Predicated region
        $region37: #{tpu_custom_call.1} parent=35 // pred_check
          %p207 = pneg %p45
        $region38: #{tpu_custom_call.1} parent=35 // pred_check_branch
          %209 = sbr.rel (%p207) target = $region40
        $region39: #{tpu_custom_call.1} parent=35 // pred_region
          %211 = dma.done %s203, 128
        $region40: #{tpu_custom_call.1} parent=35 // pred_fallthru
          _
        // Predicated region
        $region41: #{tpu_custom_call.1} parent=35 // pred_check
          %p212 = pneg %p66
        $region42: #{tpu_custom_call.1} parent=35 // pred_check_branch
          %214 = sbr.rel (%p212) target = $region44
        $region43: #{tpu_custom_call.1} parent=35 // pred_region
          %216 = dma.done [#allocation6], 48
        $region44: #{tpu_custom_call.1} parent=35 // pred_fallthru
          _
        // Predicated region
        $region45: #{tpu_custom_call.1} parent=35 // pred_check
          %p217 = pneg %p87
        $region46: #{tpu_custom_call.1} parent=35 // pred_check_branch
          %219 = sbr.rel (%p217) target = $region48
        $region47: #{tpu_custom_call.1} parent=35 // pred_region
          %221 = dma.done [#allocation7], 32
        $region48: #{tpu_custom_call.1} parent=35 // pred_fallthru
          _
        %222 = sfence
        %s223 = sand.u32 %s32, 1
        %s224 = scalar_lea.sflag [#allocation4], %s223
        %s225 = sand.u32 %s32, 1
        %s226 = smul.addr %s225, 8
        %s227 = scalar_lea.vmem [#allocation3], %s226
        %p228 = pneg %p45
        %p229 = pneg %p42
        %p230 = pneg %p66
        %p231 = pneg %p63
        %p232 = pneg %p87
        %p233 = pneg %p84
        %p234 = pneg %p108
        %p235 = pneg %p105
        %p236 = pneg %p134
        %p237 = pneg %p131
        %s238 = sand.u32 %s121, 1
        %s239 = scalar_lea.sflag [#allocation5], %s238
        %s240 = sand.u32 %s121, 1
        %s241 = smul.addr %s240, 8
        %s242 = scalar_lea.vmem [#allocation10], %s241
        %s243 = sld [smem:[#allocation2]]
        %s244 = sld [smem:[#allocation8]]
        %s245 = smax.f32 %s244, 0.0
        %v246 = vstv %s245
        %v247 = vld [vmem:[%s206] sm:$0xff]
        // While loop
        $region49: #{tpu_custom_call.1} parent=35 // loop_pre_header
          _
        $region50: #{tpu_custom_call.1} parent=35 // loop_header
          %s249 = sphi %s243, %s251
          %p250 = scmp.ge.s32.totalorder %s249, 32
          %v254 = vphi %v246, %v311
        $region51: #{tpu_custom_call.1} parent=35 // loop_header_branch
          %253 = sbr.rel (%p250) target = $region55
        $region52: #{tpu_custom_call.1} parent=35 // loop_body
          %s255 = smul.u32 %s249, 8
          %s256 = sld [smem:[#allocation9 + %s255]]
          %v257 = vstv %s256
          %vm258 = vcmp.gt.f32.partialorder %v247, %v257
          %s259 = sadd.s32 %s255, 1
          %s260 = sld [smem:[#allocation8 + %s259]]
          %v261 = vstv %s260
          %v262 = vsel %vm258, %v261, %v254
          %s263 = sld [smem:[#allocation9 + %s259]]
          %v264 = vstv %s263
          %vm265 = vcmp.gt.f32.partialorder %v247, %v264
          %s266 = sadd.s32 %s255, 2
          %s267 = sld [smem:[#allocation8 + %s266]]
          %v268 = vstv %s267
          %v269 = vsel %vm265, %v268, %v262
          %s270 = sld [smem:[#allocation9 + %s266]]
          %v271 = vstv %s270
          %vm272 = vcmp.gt.f32.partialorder %v247, %v271
          %s273 = sadd.s32 %s255, 3
          %s274 = sld [smem:[#allocation8 + %s273]]
          %v275 = vstv %s274
          %v276 = vsel %vm272, %v275, %v269
          %s277 = sld [smem:[#allocation9 + %s273]]
          %v278 = vstv %s277
          %vm279 = vcmp.gt.f32.partialorder %v247, %v278
          %s280 = sadd.s32 %s255, 4
          %s281 = sld [smem:[#allocation8 + %s280]]
          %v282 = vstv %s281
          %v283 = vsel %vm279, %v282, %v276
          %s284 = sld [smem:[#allocation9 + %s280]]
          %v285 = vstv %s284
          %vm286 = vcmp.gt.f32.partialorder %v247, %v285
          %s287 = sadd.s32 %s255, 5
          %s288 = sld [smem:[#allocation8 + %s287]]
          %v289 = vstv %s288
          %v290 = vsel %vm286, %v289, %v283
          %s291 = sld [smem:[#allocation9 + %s287]]
          %v292 = vstv %s291
          %vm293 = vcmp.gt.f32.partialorder %v247, %v292
          %s294 = sadd.s32 %s255, 6
          %s295 = sld [smem:[#allocation8 + %s294]]
          %v296 = vstv %s295
          %v297 = vsel %vm293, %v296, %v290
          %s298 = sld [smem:[#allocation9 + %s294]]
          %v299 = vstv %s298
          %vm300 = vcmp.gt.f32.partialorder %v247, %v299
          %s301 = sadd.s32 %s255, 7
          %s302 = sld [smem:[#allocation8 + %s301]]
          %v303 = vstv %s302
          %v304 = vsel %vm300, %v303, %v297
          %s305 = sld [smem:[#allocation9 + %s301]]
          %v306 = vstv %s305
          %vm307 = vcmp.gt.f32.partialorder %v247, %v306
          %s308 = sadd.s32 %s255, 8
          %s309 = sld [smem:[#allocation8 + %s308]]
          %v310 = vstv %s309
          %v311 = vsel %vm307, %v310, %v304
        $region53: #{tpu_custom_call.1} parent=35 // loop_footer
          %s251 = sadd.s32 %s249, 1
        $region54: #{tpu_custom_call.1} parent=35 // loop_footer_branch
          %248 = sbr.rel target = $region50
        $region55: #{tpu_custom_call.1} parent=35 // loop_exit
          _
        %v312 = vmax.f32 %v254, 0.0
        %313 = vst [vmem:[%s242] sm:$0xff] %v312
        %s314 = sand.u32 %s121, 1
        %s315 = scalar_lea.sflag [#allocation5], %s314
        %s316 = sand.u32 %s121, 1
        %s317 = smul.addr %s316, 8
        %s318 = scalar_lea.vmem [#allocation10], %s317
        // Predicated region
        $region56: #{tpu_custom_call.1} parent=35 // pred_check
          %p319 = pneg %p131
        $region57: #{tpu_custom_call.1} parent=35 // pred_check_branch
          %321 = sbr.rel (%p319) target = $region59
        $region58: #{tpu_custom_call.1} parent=35 // pred_region
          %323 = vsyncadd %s315, 0
          %s324 = smul.addr %s24, 8
          %s325 = scalar_lea.hbm %s4, %s324
          %s327 = sshll.u32 %s318, 4
          %s328 = int_to_ptr.vmem [resolvable:$true] %s327
          %s329 = sshll.u32 %s325, 4
          %s330 = int_to_ptr.hbm [resolvable:$true] %s329
          %332 = dma.vmem_to_hbm [thread:$0]  %s328, 128, %s330, %s315
        $region59: #{tpu_custom_call.1} parent=35 // pred_fallthru
          _
      $region36: #{tpu_custom_call.1} parent=5 // pred_fallthru
        _
      %p333 = scmp.le.s32.totalorder 2, %s19
      // Predicated region
      $region60: #{tpu_custom_call.1} parent=5 // pred_check
        %p334 = pneg %p333
      $region61: #{tpu_custom_call.1} parent=5 // pred_check_branch
        %336 = sbr.rel (%p334) target = $region63
      $region62: #{tpu_custom_call.1} parent=5 // pred_region
        %s337 = ssub.s32 %s19, 2
        // Predicated region
        $region64: #{tpu_custom_call.1} parent=62 // pred_check
          %p338 = pneg %p137
        $region65: #{tpu_custom_call.1} parent=62 // pred_check_branch
          %340 = sbr.rel (%p338) target = $region67
        $region66: #{tpu_custom_call.1} parent=62 // pred_region
          %s341 = sand.u32 %s122, 1
          %s342 = scalar_lea.sflag [#allocation5], %s341
          %s343 = sand.u32 %s122, 1
          %s344 = smul.addr %s343, 8
          %s345 = scalar_lea.vmem [#allocation10], %s344
          %347 = dma.done %s342, 128
        $region67: #{tpu_custom_call.1} parent=62 // pred_fallthru
          _
      $region63: #{tpu_custom_call.1} parent=5 // pred_fallthru
        _
    $region6: #{tpu_custom_call.1} parent=1 // loop_footer
      %s23 = sadd.s32 1, %s19
    $region7: #{tpu_custom_call.1} parent=1 // loop_footer_branch
      %18 = sbr.rel target = $region3
    $region8: #{tpu_custom_call.1} parent=1 // loop_exit
      _
    %348 = vsyncpa [#allocation4], 1
    %s349 = scalar_lea.sflag [#allocation4], 1
    %350 = vsyncpa %s349, 1
    %351 = vsyncpa [#allocation5], 1
    %s352 = scalar_lea.sflag [#allocation5], 1
    %353 = vsyncpa %s352, 1
    %354 = vsyncpa [#allocation6], 1
    %s355 = scalar_lea.sflag [#allocation6], 1
    %356 = vsyncpa %s355, 1
    %357 = vsyncpa [#allocation7], 1
    %s358 = scalar_lea.sflag [#allocation7], 1
    %359 = vsyncpa %s358, 1

</llo_original>
